<compile_context>
chip_gen: v7x
topology: tpu7x:2x2x1
jax: 0.10.0
libtpu: 0.0.40
codegen_flags: <defaults>
</compile_context>

<pallas_src>
import math

import jax
import jax.numpy as jnp
from jax import lax
from jax.experimental import pallas as pl
from jax.experimental.pallas import tpu as pltpu


_VMEM_LIMIT_BYTES = 48 * 1024 * 1024   # <= 48 MiB: safe on v7x (64 MiB phys),
                                       # ample headroom on v5e/v6e (128 MiB).
_MAX_TILE_ROWS = 2048                  # amortizes ~0.35 us/grid-step overhead.


def _lane_pack_factor(batch, num_classes, itemsize):
    """Largest power-of-two k (dividing batch) so k*num_classes fills lanes."""
    if num_classes % 128 == 0:
        return 1
    k = 128 // math.gcd(num_classes, 128)   # minimal k with k*C % 128 == 0
    while k > 1 and batch % k != 0:
        k //= 2                             # partial packing still helps
    while k > 1 and k * num_classes * itemsize > 65536:
        k //= 2                             # don't inflate already-large rows
    return k


def f1_score_loss(y_true, y_pred):
    """Soft F1 loss. y_true, y_pred: (batch, num_classes). Returns scalar f32."""
    assert y_true.shape == y_pred.shape and y_true.ndim == 2
    B, C = y_true.shape
    itemsize = jnp.dtype(y_pred.dtype).itemsize

    # ---- lane-dense repacking (free row-major reshape, no data movement) ----
    k = _lane_pack_factor(B, C, itemsize)
    BP, CP = B // k, k * C
    yt_in = y_true.reshape(BP, CP) if k > 1 else y_true
    yp_in = y_pred.reshape(BP, CP) if k > 1 else y_pred
    if BP < 8:
        # Tiny inputs only: zero rows are exactly neutral for tp/sum_yt/sum_yp,
        # so pad up to one full sublane group and keep a single aligned path.
        pad = 8 - BP
        yt_in = jnp.pad(yt_in, ((0, pad), (0, 0)))
        yp_in = jnp.pad(yp_in, ((0, pad), (0, 0)))
        BP = 8

    # ---- batch-tile selection from a VMEM budget -----------------------------
    input_budget = _VMEM_LIMIT_BYTES // 2            # 2 inputs x 2 pipeline bufs
    tb_cap = max(8, input_budget // (2 * 2 * CP * itemsize))
    TB = min(BP, tb_cap, _MAX_TILE_ROWS)
    TB = max(8, (TB // 8) * 8)
    if itemsize == 2 and TB >= 16:
        TB = (TB // 16) * 16                         # bf16 sublane packing
    elif itemsize == 1 and TB >= 32:
        TB = (TB // 32) * 32

    num_tiles = -(-BP // TB)
    needs_mask = (BP % TB) != 0
    valid_tail = BP - (num_tiles - 1) * TB           # valid rows in last tile

    def kernel(yt_ref, yp_ref, acc_ref):
        i = pl.program_id(0)

        @pl.when(i == 0)
        def _init():
            acc_ref[...] = jnp.zeros_like(acc_ref)

        yt = yt_ref[...].astype(jnp.float32)
        yp = yp_ref[...].astype(jnp.float32)

        def accumulate(yt, yp):
            # Per-sublane partials only: pure VALU adds in the hot loop; the
            # cross-sublane (XLU) collapse is deferred to the JAX epilogue.
            g = TB // 8
            tp_p = (yt * yp).reshape(g, 8, CP).sum(axis=0)
            syt_p = yt.reshape(g, 8, CP).sum(axis=0)
            syp_p = yp.reshape(g, 8, CP).sum(axis=0)
            # Single read-modify-write of the merged (3*8, CP) accumulator.
            acc_ref[...] += jnp.concatenate([tp_p, syt_p, syp_p], axis=0)

        if needs_mask:
            last = pl.num_programs(0) - 1

            @pl.when(i < last)
            def _full_tile():
                accumulate(yt, yp)

            @pl.when(i == last)
            def _tail_tile():
                # Only the final tile has undefined padded rows; zero them.
                row = lax.broadcasted_iota(jnp.int32, (TB, 1), 0)
                keep = row < valid_tail
                accumulate(jnp.where(keep, yt, 0.0),
                           jnp.where(keep, yp, 0.0))
        else:
            accumulate(yt, yp)

    acc = pl.pallas_call(
        kernel,
        out_shape=jax.ShapeDtypeStruct((3 * 8, CP), jnp.float32),
        grid=(num_tiles,),
        in_specs=[
            pl.BlockSpec((TB, CP), lambda i: (i, 0)),
            pl.BlockSpec((TB, CP), lambda i: (i, 0)),
        ],
        out_specs=pl.BlockSpec((3 * 8, CP), lambda i: (0, 0)),
        compiler_params=pltpu.CompilerParams(
            dimension_semantics=("arbitrary",),       # batch axis is a reduction
            vmem_limit_bytes=_VMEM_LIMIT_BYTES,
        ),
    )(yt_in, yp_in)

    # ---- tiny epilogue in plain JAX (runs once per call) ---------------------
    # Collapse the 8 sublane partials and the k lane replicas back to (3, C).
    sums = acc.reshape(3, 8, k, C).sum(axis=(1, 2))
    tp, sum_yt, sum_yp = sums[0], sums[1], sums[2]
    eps = jnp.float32(1e-8)
    fp = sum_yp - tp                      # sum((1 - yt) * yp) == sum(yp) - tp
    fn = sum_yt - tp                      # sum(yt * (1 - yp)) == sum(yt) - tp
    precision = tp / (tp + fp + eps)
    recall = tp / (tp + fn + eps)
    f1 = 2.0 * precision * recall / (precision + recall + eps)
    return (jnp.float32(1.0) - jnp.mean(f1)).astype(jnp.float32)


def _reference(y_true, y_pred):
    # Pure-JAX reference mirroring the PyTorch module exactly.
    tp = jnp.sum(y_true * y_pred, axis=0)
    fp = jnp.sum((1 - y_true) * y_pred, axis=0)
    fn = jnp.sum(y_true * (1 - y_pred), axis=0)
    precision = tp / (tp + fp + 1e-8)
    recall = tp / (tp + fn + 1e-8)
    f1 = 2 * precision * recall / (precision + recall + 1e-8)
    return 1 - f1.mean()


def _make_inputs(key, batch, num_classes):
    k1, k2 = jax.random.split(key)
    labels = jax.random.randint(k1, (batch,), 0, num_classes)
    y_true = jax.nn.one_hot(labels, num_classes, dtype=jnp.float32)
    logits = jax.random.normal(k2, (batch, num_classes), dtype=jnp.float32)
    y_pred = jax.nn.softmax(logits, axis=-1)
    return y_true, y_pred


if __name__ == "__main__":
    key = jax.random.PRNGKey(0)
    k1, k2, k3 = jax.random.split(key, 3)

    # 1) Small demo shape: B=8, C=16 (fully lane-packed, single tile).
    y_true, y_pred = _make_inputs(k1, 8, 16)
    loss = f1_score_loss(y_true, y_pred)
    jax.block_until_ready(loss)
    ref = _reference(y_true, y_pred)
    assert jnp.allclose(loss, ref, atol=1e-5, rtol=1e-5), (loss, ref)

    # 2) Larger batch: exercises the tiled accumulator + gated tail-mask path.
    y_true2, y_pred2 = _make_inputs(k2, 1000, 16)
    loss2 = f1_score_loss(y_true2, y_pred2)
    jax.block_until_ready(loss2)
    ref2 = _reference(y_true2, y_pred2)
    assert jnp.allclose(loss2, ref2, atol=1e-4, rtol=1e-4), (loss2, ref2)

    # 3) Batch not divisible by the full pack factor: partial lane packing.
    y_true3, y_pred3 = _make_inputs(k3, 1002, 16)
    loss3 = f1_score_loss(y_true3, y_pred3)
    jax.block_until_ready(loss3)
    ref3 = _reference(y_true3, y_pred3)
    assert jnp.allclose(loss3, ref3, atol=1e-4, rtol=1e-4), (loss3, ref3)

    print("KERNEL_OK")
</pallas_src>

<mosaic_0001>
module attributes {stable_mosaic.version = 11 : i64} {
  func.func @kernel(%arg0: i32, %arg1: memref<8x128xf32, #tpu.memory_space<vmem>>, %arg2: memref<8x128xf32, #tpu.memory_space<vmem>>, %arg3: memref<24x128xf32, #tpu.memory_space<vmem>>) attributes {dimension_semantics = [#tpu.dimension_semantics<arbitrary>], iteration_bounds = array<i64: 1>, scalar_prefetch = 0 : i64, scratch_operands = 0 : i64, tpu.core_type = #tpu.core_type<tc>, window_params = [{transform_indices = @transform_0, window_bounds = array<i64: 8, 128>}, {transform_indices = @transform_1, window_bounds = array<i64: 8, 128>}, {pipeline_mode = #tpu.pipeline_mode<synchronous>, transform_indices = @transform_2, window_bounds = array<i64: 24, 128>}]} {
    %c0_i32 = arith.constant 0 : i32
    %0 = arith.cmpi eq, %arg0, %c0_i32 : i32
    %1 = arith.extui %0 : i1 to i32
    %c0_i32_0 = arith.constant 0 : i32
    %2 = arith.cmpi ne, %1, %c0_i32_0 : i32
    scf.if %2 {
      %cst_10 = arith.constant 0.000000e+00 : f32
      %16 = vector.broadcast %cst_10 : f32 to vector<24x128xf32>
      %c0_11 = arith.constant 0 : index
      %c0_12 = arith.constant 0 : index
      %17 = vector.load %arg3[%c0_11, %c0_12] : memref<24x128xf32, #tpu.memory_space<vmem>>, vector<24x128xf32>
      tpu.vector_store %arg3[%c0_11, %c0_12], %16 {strides = array<i32>} : memref<24x128xf32, #tpu.memory_space<vmem>>, vector<24x128xf32>,
    } else {
    }
    %c0 = arith.constant 0 : index
    %c0_1 = arith.constant 0 : index
    %3 = vector.load %arg1[%c0, %c0_1] : memref<8x128xf32, #tpu.memory_space<vmem>>, vector<8x128xf32>
    %c0_2 = arith.constant 0 : index
    %c0_3 = arith.constant 0 : index
    %4 = vector.load %arg2[%c0_2, %c0_3] : memref<8x128xf32, #tpu.memory_space<vmem>>, vector<8x128xf32>
    %5 = arith.mulf %3, %4 : vector<8x128xf32>
    %6 = vector.shape_cast %5 : vector<8x128xf32> to vector<1x8x128xf32>
    %cst = arith.constant dense<0.000000e+00> : vector<8x128xf32>
    %7 = vector.multi_reduction <add>, %6, %cst [0] : vector<1x8x128xf32> to vector<8x128xf32>
    %8 = vector.shape_cast %3 : vector<8x128xf32> to vector<1x8x128xf32>
    %cst_4 = arith.constant dense<0.000000e+00> : vector<8x128xf32>
    %9 = vector.multi_reduction <add>, %8, %cst_4 [0] : vector<1x8x128xf32> to vector<8x128xf32>
    %10 = vector.shape_cast %4 : vector<8x128xf32> to vector<1x8x128xf32>
    %cst_5 = arith.constant dense<0.000000e+00> : vector<8x128xf32>
    %11 = vector.multi_reduction <add>, %10, %cst_5 [0] : vector<1x8x128xf32> to vector<8x128xf32>
    %c0_6 = arith.constant 0 : index
    %c0_7 = arith.constant 0 : index
    %12 = vector.load %arg3[%c0_6, %c0_7] : memref<24x128xf32, #tpu.memory_space<vmem>>, vector<24x128xf32>
    %13 = tpu.concatenate %7, %9, %11 in 0 : vector<8x128xf32>, vector<8x128xf32>, vector<8x128xf32> -> vector<24x128xf32>
    %14 = arith.addf %12, %13 : vector<24x128xf32>
    %c0_8 = arith.constant 0 : index
    %c0_9 = arith.constant 0 : index
    %15 = vector.load %arg3[%c0_8, %c0_9] : memref<24x128xf32, #tpu.memory_space<vmem>>, vector<24x128xf32>
    tpu.vector_store %arg3[%c0_8, %c0_9], %14 {strides = array<i32>} : memref<24x128xf32, #tpu.memory_space<vmem>>, vector<24x128xf32>,
    return
  }
  func.func @transform_0(%arg0: i32) -> (i32, i32) {
    %c0_i32 = arith.constant 0 : i32
    %c0_i32_0 = arith.constant 0 : i32
    return %arg0, %c0_i32 : i32, i32
  }
  func.func @transform_1(%arg0: i32) -> (i32, i32) {
    %c0_i32 = arith.constant 0 : i32
    %c0_i32_0 = arith.constant 0 : i32
    return %arg0, %c0_i32 : i32, i32
  }
  func.func @transform_2(%arg0: i32) -> (i32, i32) {
    %c0_i32 = arith.constant 0 : i32
    %c0_i32_0 = arith.constant 0 : i32
    %c0_i32_1 = arith.constant 0 : i32
    return %c0_i32, %c0_i32_0 : i32, i32
  }
}

</mosaic_0001>

<llo_original>
// kernel: tpu_custom_call.1
$region0: #{tpu_custom_call.1}
  #allocation0 [shape = 'u32[]', space=smem, size = 0x4, offset = 0x4, fixed_abs, tag = 'smem constant byte address 0x4 - core index']
  #allocation1 [shape = 'u32[144,128]{1,0:T(1,128)}', space=vmem, size = 0x12000, scoped, tag = 'internal scratch']
  %s0 = inlined_call_operand.hbm [shape: f32[8,128], index: 0, kind: input, shape index: {}]
  %s1 = inlined_call_operand.hbm [shape: f32[8,128], index: 1, kind: input, shape index: {}]
  %s2 = inlined_call_operand.hbm [shape: f32[24,128], index: 2, kind: output, shape index: {}]
  %s3 = sld [smem:[#allocation0]]
  $region30: #{tpu_custom_call.1} parent=0
    _
  %s5 = ssub.s32 1, %s3
  %s6 = scalar_select 0, %s5, %s3
  $region1: #{tpu_custom_call.1} parent=0
    #allocation2 [shape = 'u8[4096]{0}', space=vmem, size = 0x1000, scoped, tag = 'input window, operand 0, single buffered']
    #allocation3 [shape = 's32[1]{0}', space=sflag, size = 0x4, scoped, tag = 'scoped memory for tpu_custom_call.1']
    #allocation4 [shape = 's32[1]{0}', space=sflag, size = 0x4, scoped, tag = 'scoped memory for tpu_custom_call.1']
    #allocation5 [shape = 'u8[4096]{0}', space=vmem, size = 0x1000, scoped, tag = 'input window, operand 1, single buffered']
    #allocation6 [shape = 's32[1]{0}', space=sflag, size = 0x4, scoped, tag = 'scoped memory for tpu_custom_call.1']
    #allocation7 [shape = 'u8[12288]{0}', space=vmem, size = 0x3000, scoped, tag = 'output window, operand 0, single buffered']
    %7 = vsyncpa [#allocation3], 0
    %8 = vsyncpa [#allocation6], 0
    %9 = vsyncpa [#allocation4], 0
    // Predicated region
    $region2: #{tpu_custom_call.1} parent=1 // pred_check
      _
    $region3: #{tpu_custom_call.1} parent=1 // pred_check_branch
      %11 = sbr.rel (0) target = $region5
    $region4: #{tpu_custom_call.1} parent=1 // pred_region
      %s13 = ssub.s32 128, 128
      %14 = vsyncadd [#allocation3], %s13
      %s16 = sshll.u32 [#allocation2], 4
      %s17 = int_to_ptr.vmem [resolvable:$true] %s16
      %19 = dma.hbm_to_vmem [thread:$0]  %s0, 128, %s17, [#allocation3]
    $region5: #{tpu_custom_call.1} parent=1 // pred_fallthru
      _
    // Predicated region
    $region6: #{tpu_custom_call.1} parent=1 // pred_check
      _
    $region7: #{tpu_custom_call.1} parent=1 // pred_check_branch
      %21 = sbr.rel (0) target = $region9
    $region8: #{tpu_custom_call.1} parent=1 // pred_region
      %s23 = ssub.s32 128, 128
      %24 = vsyncadd [#allocation6], %s23
      %s26 = sshll.u32 [#allocation5], 4
      %s27 = int_to_ptr.vmem [resolvable:$true] %s26
      %29 = dma.hbm_to_vmem [thread:$0]  %s1, 128, %s27, [#allocation6]
    $region9: #{tpu_custom_call.1} parent=1 // pred_fallthru
      _
    // Predicated region
    $region10: #{tpu_custom_call.1} parent=1 // pred_check
      _
    $region11: #{tpu_custom_call.1} parent=1 // pred_check_branch
      %31 = sbr.rel (0) target = $region13
    $region12: #{tpu_custom_call.1} parent=1 // pred_region
      %32 = dma.done [#allocation3], 128
    $region13: #{tpu_custom_call.1} parent=1 // pred_fallthru
      _
    // Predicated region
    $region14: #{tpu_custom_call.1} parent=1 // pred_check
      _
    $region15: #{tpu_custom_call.1} parent=1 // pred_check_branch
      %34 = sbr.rel (0) target = $region17
    $region16: #{tpu_custom_call.1} parent=1 // pred_region
      %35 = dma.done [#allocation6], 128
    $region17: #{tpu_custom_call.1} parent=1 // pred_fallthru
      _
    %p36 = scmp.eq.s32.totalorder 0, 0
    // Predicated region
    $region18: #{tpu_custom_call.1} parent=1 // pred_check
      %p37 = pneg %p36
    $region19: #{tpu_custom_call.1} parent=1 // pred_check_branch
      %39 = sbr.rel (%p37) target = $region21
    $region20: #{tpu_custom_call.1} parent=1 // pred_region
      %40 = vst [vmem:[#allocation7] sm:$0xff] 0.0
      %41 = vst [vmem:[#allocation7 + $0x8] sm:$0xff] 0.0
      %42 = vst [vmem:[#allocation7 + $0x10] sm:$0xff] 0.0
    $region21: #{tpu_custom_call.1} parent=1 // pred_fallthru
      _
    %v43 = vld [vmem:[#allocation2] sm:$0xff]
    %v44 = vld [vmem:[#allocation5] sm:$0xff]
    %v45 = vmul.f32 %v43, %v44
    %v46 = vadd.f32 %v45, 0.0
    %v47 = vadd.f32 %v43, 0.0
    %v48 = vadd.f32 %v44, 0.0
    %v49 = vld [vmem:[#allocation7] sm:$0xff]
    %v50 = vld [vmem:[#allocation7 + $0x8] sm:$0xff]
    %v51 = vld [vmem:[#allocation7 + $0x10] sm:$0xff]
    %v52 = vadd.f32 %v49, %v46
    %v53 = vadd.f32 %v50, %v47
    %v54 = vadd.f32 %v51, %v48
    %55 = vst [vmem:[#allocation7] sm:$0xff] %v52
    %56 = vst [vmem:[#allocation7 + $0x8] sm:$0xff] %v53
    %57 = vst [vmem:[#allocation7 + $0x10] sm:$0xff] %v54
    // Predicated region
    $region22: #{tpu_custom_call.1} parent=1 // pred_check
      _
    $region23: #{tpu_custom_call.1} parent=1 // pred_check_branch
      %59 = sbr.rel (0) target = $region25
    $region24: #{tpu_custom_call.1} parent=1 // pred_region
      %s61 = ssub.s32 384, 384
      %62 = vsyncadd [#allocation4], %s61
      %s63 = sshll.u32 [#allocation7], 4
      %s64 = int_to_ptr.vmem [resolvable:$true] %s63
      %69 = dma.vmem_to_hbm [thread:$0]  %s64, 384, %s2, [#allocation4], 128, 128, 8
    $region25: #{tpu_custom_call.1} parent=1 // pred_fallthru
      _
    // Predicated region
    $region26: #{tpu_custom_call.1} parent=1 // pred_check
      _
    $region27: #{tpu_custom_call.1} parent=1 // pred_check_branch
      %71 = sbr.rel (0) target = $region29
    $region28: #{tpu_custom_call.1} parent=1 // pred_region
      %72 = dma.done [#allocation4], 384
    $region29: #{tpu_custom_call.1} parent=1 // pred_fallthru
      _
    %73 = vsyncpa [#allocation3], 1
    %74 = vsyncpa [#allocation6], 1
    %75 = vsyncpa [#allocation4], 1

</llo_original>
